<compile_context>
chip_gen: v5e
topology: v5e:2x2
jax: 0.10.0
libtpu: 0.0.40
codegen_flags: <defaults>
</compile_context>

<pallas_src>
import jax
import jax.numpy as jnp
from jax import lax
from jax.experimental import pallas as pl
from jax.experimental.pallas import tpu as pltpu


def _swiglu_kernel(x_ref, w1_ref, w2_ref, w3_ref, o_ref, acc_ref):
    # x_ref:  (tm, D)        activation row tile
    # w1_ref: (th, D)        gate-proj slab, torch (H, D) layout
    # w2_ref: (th, D)        up-proj slab,   torch (H, D) layout
    # w3_ref: (D, th)        down-proj slab, torch (D, H) layout
    # o_ref:  (tm, D)        output tile (resident across the H grid axis)
    # acc_ref:(tm, D) f32    accumulator scratch
    h_idx = pl.program_id(1)

    @pl.when(h_idx == 0)
    def _():
        acc_ref[...] = jnp.zeros_like(acc_ref)

    x = x_ref[...]
    # Contract x's feature dim against weight dim 1 (i.e. x @ W.T) without
    # materializing any transposed weight copy.
    dn = (((1,), (1,)), ((), ()))
    gate = lax.dot_general(x, w1_ref[...], dn, preferred_element_type=jnp.float32)
    up = lax.dot_general(x, w2_ref[...], dn, preferred_element_type=jnp.float32)
    h = gate * lax.logistic(gate) * up            # SiLU(gate) * up; EUP + VPU, f32
    # Partial down-projection for this H slab: y += h_slab @ W3[:, slab].T
    acc_ref[...] += lax.dot_general(
        h.astype(x.dtype), w3_ref[...], dn, preferred_element_type=jnp.float32
    )

    @pl.when(h_idx == pl.num_programs(1) - 1)
    def _():
        o_ref[...] = acc_ref[...].astype(o_ref.dtype)


def _pick_h_tile(H, desired, mult=128):
    """Largest multiple of `mult` <= desired that divides H (else full H)."""
    if H <= desired:
        return H
    t = (desired // mult) * mult
    while t >= mult:
        if H % t == 0:
            return t
        t -= mult
    return H


def _vmem_cap_bytes():
    try:
        return int(pltpu.get_tpu_info().vmem_capacity_bytes)
    except Exception:
        return 64 * 1024 * 1024  # conservative (v7x per-TC VMEM)


def llama_mlp_forward(x, w1, w2, w3, *, tm=256, th=512, vmem_limit_bytes=None):
    """SwiGLU MLP forward (bias=False, unpacked weights).

    x : (B, T, D)
    w1: (H, D) torch nn.Linear layout (gate projection)
    w2: (H, D) torch nn.Linear layout (up projection)
    w3: (D, H) torch nn.Linear layout (down projection)
    """
    B, T, D = x.shape
    H, D1 = w1.shape
    assert D1 == D and w2.shape == (H, D) and w3.shape == (D, H)

    M = B * T
    x2 = x.reshape(M, D)

    # Row tile: clamp to the problem size, snap to the sublane packing.
    sub = 16 if x.dtype == jnp.bfloat16 else 8
    tm = max(sub, min(int(tm), pl.cdiv(M, sub) * sub))
    tm = (tm // sub) * sub
    Mp = pl.cdiv(M, tm) * tm
    if Mp != M:                                   # ragged rows -> zero-pad
        x2 = jnp.pad(x2, ((0, Mp - M), (0, 0)))

    # Intermediate-dim tile: multiple of 128 lanes that divides H (or full H).
    th = _pick_h_tile(H, int(th))

    grid = (Mp // tm, H // th)

    # VMEM budget from the actual tile footprint (double-buffered pipeline).
    xb = jnp.dtype(x.dtype).itemsize
    wb = jnp.dtype(w1.dtype).itemsize
    est = (
        2 * tm * D * xb            # x tile, double buffered
        + 2 * 2 * th * D * wb      # W1 + W2 slabs, double buffered
        + 2 * D * th * wb          # W3 slab, double buffered
        + 2 * tm * D * xb          # output tile, double buffered
        + tm * D * 4               # f32 accumulator scratch
    )
    if vmem_limit_bytes is None:
        cap = _vmem_cap_bytes()
        vmem_limit_bytes = min(max(int(1.5 * est), 32 * 1024 * 1024), cap)

    # Advisory cost hint for XLA's scheduler around the custom call.
    flops = 2 * M * D * H * 3            # three (M,D)x(D,H)-sized matmuls
    transcendentals = M * H              # logistic in SiLU
    bytes_accessed = (M * D * xb) * 2 + (3 * H * D * wb)
    cost = pl.CostEstimate(
        flops=flops, transcendentals=transcendentals, bytes_accessed=bytes_accessed
    )

    out = pl.pallas_call(
        _swiglu_kernel,
        out_shape=jax.ShapeDtypeStruct((Mp, D), x.dtype),
        grid_spec=pltpu.PrefetchScalarGridSpec(
            num_scalar_prefetch=0,
            grid=grid,
            in_specs=[
                pl.BlockSpec((tm, D), lambda i, h: (i, 0)),   # x row tile
                pl.BlockSpec((th, D), lambda i, h: (h, 0)),   # W1 slab (H, D)
                pl.BlockSpec((th, D), lambda i, h: (h, 0)),   # W2 slab (H, D)
                pl.BlockSpec((D, th), lambda i, h: (0, h)),   # W3 slab (D, H)
            ],
            out_specs=pl.BlockSpec((tm, D), lambda i, h: (i, 0)),
            scratch_shapes=[pltpu.VMEM((tm, D), jnp.float32)],
        ),
        compiler_params=pltpu.CompilerParams(
            dimension_semantics=("parallel", "arbitrary"),
            vmem_limit_bytes=int(vmem_limit_bytes),
        ),
        cost_estimate=cost,
    )(x2, w1, w2, w3)

    return out[:M].reshape(B, T, D)


def llama_mlp_reference(x, w1, w2, w3):
    gate = jnp.einsum("btd,hd->bth", x, w1)
    up = jnp.einsum("btd,hd->bth", x, w2)
    h = jax.nn.silu(gate) * up
    return jnp.einsum("bth,dh->btd", h, w3)


if __name__ == "__main__":
    # Small config consistent with the module: n_embd=256, intermediate=512.
    B, T, D, H = 2, 20, 256, 512   # M = 40 (ragged on purpose: exercises padding)

    key = jax.random.PRNGKey(0)
    kx, k1, k2, k3 = jax.random.split(key, 4)

    x = jax.random.normal(kx, (B, T, D), dtype=jnp.float32)
    # torch.nn.Linear weight layout: (out_features, in_features), bias=False.
    w1 = jax.random.normal(k1, (H, D), dtype=jnp.float32) * 0.02  # gate proj
    w2 = jax.random.normal(k2, (H, D), dtype=jnp.float32) * 0.02  # up proj
    w3 = jax.random.normal(k3, (D, H), dtype=jnp.float32) * 0.02  # down proj

    y_ref = llama_mlp_reference(x, w1, w2, w3)

    # Small explicit tiles -> multi-step grid (3 row tiles x 4 H slabs):
    # exercises the pl.when init/accumulate/finalize path and row padding.
    y_tiled = llama_mlp_forward(x, w1, w2, w3, tm=16, th=128)
    y_tiled = jax.block_until_ready(y_tiled)
    assert y_tiled.shape == (B, T, D)
    assert jnp.allclose(y_tiled, y_ref, atol=2e-4, rtol=2e-3)

    # Production-style defaults (tiles get clamped to the toy problem size).
    y_def = llama_mlp_forward(x, w1, w2, w3)
    y_def = jax.block_until_ready(y_def)
    assert jnp.allclose(y_def, y_ref, atol=2e-4, rtol=2e-3)

    print("KERNEL_OK")
</pallas_src>

<mosaic_0001>
module attributes {stable_mosaic.version = 11 : i64} {
  func.func @_swiglu_kernel(%arg0: i32, %arg1: i32, %arg2: memref<16x256xf32, #tpu.memory_space<vmem>>, %arg3: memref<128x256xf32, #tpu.memory_space<vmem>>, %arg4: memref<128x256xf32, #tpu.memory_space<vmem>>, %arg5: memref<256x128xf32, #tpu.memory_space<vmem>>, %arg6: memref<16x256xf32, #tpu.memory_space<vmem>>, %arg7: memref<16x256xf32, #tpu.memory_space<vmem>>) attributes {dimension_semantics = [#tpu.dimension_semantics<parallel>, #tpu.dimension_semantics<arbitrary>], iteration_bounds = array<i64: 3, 4>, scalar_prefetch = 0 : i64, scratch_operands = 1 : i64, tpu.core_type = #tpu.core_type<tc>, window_params = [{transform_indices = @transform_0, window_bounds = array<i64: 16, 256>}, {transform_indices = @transform_1, window_bounds = array<i64: 128, 256>}, {transform_indices = @transform_2, window_bounds = array<i64: 128, 256>}, {transform_indices = @transform_3, window_bounds = array<i64: 256, 128>}, {transform_indices = @transform_4, window_bounds = array<i64: 16, 256>}]} {
    %c0_i32 = arith.constant 0 : i32
    %0 = arith.cmpi eq, %arg1, %c0_i32 : i32
    %1 = arith.extui %0 : i1 to i32
    %c0_i32_0 = arith.constant 0 : i32
    %2 = arith.cmpi ne, %1, %c0_i32_0 : i32
    scf.if %2 {
      %cst_16 = arith.constant 0.000000e+00 : f32
      %23 = vector.broadcast %cst_16 : f32 to vector<16x256xf32>
      %c0_17 = arith.constant 0 : index
      %c0_18 = arith.constant 0 : index
      %24 = vector.load %arg7[%c0_17, %c0_18] : memref<16x256xf32, #tpu.memory_space<vmem>>, vector<16x256xf32>
      tpu.vector_store %arg7[%c0_17, %c0_18], %23 {strides = array<i32>} : memref<16x256xf32, #tpu.memory_space<vmem>>, vector<16x256xf32>,
    } else {
    }
    %c0 = arith.constant 0 : index
    %c0_1 = arith.constant 0 : index
    %3 = vector.load %arg2[%c0, %c0_1] : memref<16x256xf32, #tpu.memory_space<vmem>>, vector<16x256xf32>
    %c0_2 = arith.constant 0 : index
    %c0_3 = arith.constant 0 : index
    %4 = vector.load %arg3[%c0_2, %c0_3] : memref<128x256xf32, #tpu.memory_space<vmem>>, vector<128x256xf32>
    %cst = arith.constant dense<0.000000e+00> : vector<16x128xf32>
    %5 = tpu.matmul %3, %4, %cst {dimension_numbers = #tpu.dot_dimension_numbers<[1], [1], [0], [0], [0, 0, 1, 0], [], []>} : vector<16x256xf32>, vector<128x256xf32>, vector<16x128xf32> -> vector<16x128xf32>
    %c0_4 = arith.constant 0 : index
    %c0_5 = arith.constant 0 : index
    %6 = vector.load %arg4[%c0_4, %c0_5] : memref<128x256xf32, #tpu.memory_space<vmem>>, vector<128x256xf32>
    %cst_6 = arith.constant dense<0.000000e+00> : vector<16x128xf32>
    %7 = tpu.matmul %3, %6, %cst_6 {dimension_numbers = #tpu.dot_dimension_numbers<[1], [1], [0], [0], [0, 0, 1, 0], [], []>} : vector<16x256xf32>, vector<128x256xf32>, vector<16x128xf32> -> vector<16x128xf32>
    %8 = arith.negf %5 : vector<16x128xf32>
    %9 = math.exp %8 : vector<16x128xf32>
    %cst_7 = arith.constant 1.000000e+00 : f32
    %10 = vector.broadcast %cst_7 : f32 to vector<16x128xf32>
    %11 = arith.addf %10, %9 : vector<16x128xf32>
    %12 = arith.divf %10, %11 : vector<16x128xf32>
    %13 = arith.mulf %5, %12 : vector<16x128xf32>
    %14 = arith.mulf %13, %7 : vector<16x128xf32>
    %c0_8 = arith.constant 0 : index
    %c0_9 = arith.constant 0 : index
    %15 = vector.load %arg7[%c0_8, %c0_9] : memref<16x256xf32, #tpu.memory_space<vmem>>, vector<16x256xf32>
    %c0_10 = arith.constant 0 : index
    %c0_11 = arith.constant 0 : index
    %16 = vector.load %arg5[%c0_10, %c0_11] : memref<256x128xf32, #tpu.memory_space<vmem>>, vector<256x128xf32>
    %cst_12 = arith.constant dense<0.000000e+00> : vector<16x256xf32>
    %17 = tpu.matmul %14, %16, %cst_12 {dimension_numbers = #tpu.dot_dimension_numbers<[1], [1], [0], [0], [0, 0, 1, 0], [], []>} : vector<16x128xf32>, vector<256x128xf32>, vector<16x256xf32> -> vector<16x256xf32>
    %18 = arith.addf %15, %17 : vector<16x256xf32>
    %c0_13 = arith.constant 0 : index
    %c0_14 = arith.constant 0 : index
    %19 = vector.load %arg7[%c0_13, %c0_14] : memref<16x256xf32, #tpu.memory_space<vmem>>, vector<16x256xf32>
    tpu.vector_store %arg7[%c0_13, %c0_14], %18 {strides = array<i32>} : memref<16x256xf32, #tpu.memory_space<vmem>>, vector<16x256xf32>,
    %c3_i32 = arith.constant 3 : i32
    %20 = arith.cmpi eq, %arg1, %c3_i32 : i32
    %21 = arith.extui %20 : i1 to i32
    %c0_i32_15 = arith.constant 0 : i32
    %22 = arith.cmpi ne, %21, %c0_i32_15 : i32
    scf.if %22 {
      %c0_16 = arith.constant 0 : index
      %c0_17 = arith.constant 0 : index
      %23 = vector.load %arg7[%c0_16, %c0_17] : memref<16x256xf32, #tpu.memory_space<vmem>>, vector<16x256xf32>
      %c0_18 = arith.constant 0 : index
      %c0_19 = arith.constant 0 : index
      %24 = vector.load %arg6[%c0_18, %c0_19] : memref<16x256xf32, #tpu.memory_space<vmem>>, vector<16x256xf32>
      tpu.vector_store %arg6[%c0_18, %c0_19], %23 {strides = array<i32>} : memref<16x256xf32, #tpu.memory_space<vmem>>, vector<16x256xf32>,
    } else {
    }
    return
  }
  func.func @transform_0(%arg0: i32, %arg1: i32) -> (i32, i32) {
    %c0_i32 = arith.constant 0 : i32
    %c0_i32_0 = arith.constant 0 : i32
    return %arg0, %c0_i32 : i32, i32
  }
  func.func @transform_1(%arg0: i32, %arg1: i32) -> (i32, i32) {
    %c0_i32 = arith.constant 0 : i32
    %c0_i32_0 = arith.constant 0 : i32
    return %arg1, %c0_i32 : i32, i32
  }
  func.func @transform_2(%arg0: i32, %arg1: i32) -> (i32, i32) {
    %c0_i32 = arith.constant 0 : i32
    %c0_i32_0 = arith.constant 0 : i32
    return %arg1, %c0_i32 : i32, i32
  }
  func.func @transform_3(%arg0: i32, %arg1: i32) -> (i32, i32) {
    %c0_i32 = arith.constant 0 : i32
    %c0_i32_0 = arith.constant 0 : i32
    return %c0_i32, %arg1 : i32, i32
  }
  func.func @transform_4(%arg0: i32, %arg1: i32) -> (i32, i32) {
    %c0_i32 = arith.constant 0 : i32
    %c0_i32_0 = arith.constant 0 : i32
    return %arg0, %c0_i32 : i32, i32
  }
}

</mosaic_0001>

<llo_original>
// kernel: tpu_custom_call.1
$region0: #{tpu_custom_call.1}
  #allocation0 [shape = 'u32[]', space=smem, size = 0x4, offset = 0x4, fixed_abs, tag = 'smem constant byte address 0x4 - core index']
  #allocation1 [shape = 'u32[72,128]{1,0:T(1,128)}', space=vmem, size = 0x9000, scoped, tag = 'internal scratch']
  #allocation2 [shape = 'f32[16,256]{1,0:T(8,128)}', space=vmem, size = 0x4000, scoped, tag = 'scratch operand']
  %s0 = inlined_call_operand.hbm [shape: f32[48,256], index: 0, kind: input, shape index: {}]
  %s1 = inlined_call_operand.hbm [shape: f32[512,256], index: 1, kind: input, shape index: {}]
  %s2 = inlined_call_operand.hbm [shape: f32[512,256], index: 2, kind: input, shape index: {}]
  %s3 = inlined_call_operand.hbm [shape: f32[256,512], index: 3, kind: input, shape index: {}]
  %s4 = inlined_call_operand.hbm [shape: f32[48,256], index: 4, kind: output, shape index: {}]
  %s5 = sld [smem:[#allocation0]]
  $region73: #{tpu_custom_call.1} parent=0
    _
  %s7 = ssub.s32 1, %s5
  %s8 = scalar_select 0, %s7, %s5
  $region1: #{tpu_custom_call.1} parent=0
    #allocation3 [shape = 'u8[32768]{0}', space=vmem, size = 0x8000, scoped, tag = 'input window, operand 0']
    #allocation4 [shape = 's32[2]{0}', space=sflag, size = 0x8, scoped, tag = 'scoped memory for tpu_custom_call.1']
    #allocation5 [shape = 's32[2]{0}', space=sflag, size = 0x8, scoped, tag = 'scoped memory for tpu_custom_call.1']
    #allocation6 [shape = 'u8[262144]{0}', space=vmem, size = 0x40000, scoped, tag = 'input window, operand 1']
    #allocation7 [shape = 's32[2]{0}', space=sflag, size = 0x8, scoped, tag = 'scoped memory for tpu_custom_call.1']
    #allocation8 [shape = 'u8[262144]{0}', space=vmem, size = 0x40000, scoped, tag = 'input window, operand 2']
    #allocation9 [shape = 'u8[262144]{0}', space=vmem, size = 0x40000, scoped, tag = 'input window, operand 3']
    #allocation10 [shape = 's32[2]{0}', space=sflag, size = 0x8, scoped, tag = 'scoped memory for tpu_custom_call.1']
    #allocation11 [shape = 'u8[32768]{0}', space=vmem, size = 0x8000, scoped, tag = 'output window, operand 0']
    %9 = vsyncpa [#allocation4], 0
    %s10 = scalar_lea.sflag [#allocation4], 1
    %11 = vsyncpa %s10, 0
    %12 = vsyncpa [#allocation7], 0
    %s13 = scalar_lea.sflag [#allocation7], 1
    %14 = vsyncpa %s13, 0
    %15 = vsyncpa [#allocation10], 0
    %s16 = scalar_lea.sflag [#allocation10], 1
    %17 = vsyncpa %s16, 0
    %18 = vsyncpa [#allocation5], 0
    %s19 = scalar_lea.sflag [#allocation5], 1
    %20 = vsyncpa %s19, 0
    loop: start=0, step=1, limit=14
    $region2: #{tpu_custom_call.1} parent=1 // loop_pre_header
      _
    $region3: #{tpu_custom_call.1} parent=1 // loop_header
      %s22 = sphi 0, %s26
      %p23 = scmp.ge.s32.totalorder %s22, 14
      %s29 = sphi 0, %s41
      %s30 = sphi 0, %s37
      %s31 = sphi 0, %s29
      %s32 = sphi 0, %s30
      %s33 = sphi 0, %s31
      %s34 = sphi 0, %s32
      %s44 = sphi 0, %s46
      %s47 = sphi 0, %s44
      %s48 = sphi 0, %s47
      %s64 = sphi 0, %s48
      %s70 = sphi 0, %s72
      %s73 = sphi 0, %s70
      %s74 = sphi 0, %s73
      %s90 = sphi 0, %s74
      %s96 = sphi 0, %s98
      %s99 = sphi 0, %s96
      %s100 = sphi 0, %s99
      %s116 = sphi 0, %s100
      %s122 = sphi 0, %s124
      %s125 = sphi 0, %s122
      %s126 = sphi 0, %s125
      %s142 = sphi 0, %s126
      %s148 = sphi 0, %s150
      %s151 = sphi 0, %s148
      %s152 = sphi 0, %s151
      %s168 = sphi 0, %s152
    $region4: #{tpu_custom_call.1} parent=1 // loop_header_branch
      %25 = sbr.rel (%p23) target = $region8
    $region5: #{tpu_custom_call.1} parent=1 // loop_body
      %s27 = ssub.s32 %s22, 1
      %s28 = ssub.s32 %s22, 2
      %s35 = sadd.s32 1, %s30
      %p36 = scmp.ge.s32.totalorder %s35, 4
      %s37 = scalar_select %p36, 0, %s35
      %s38 = sadd.s32 1, %s29
      %s39 = scalar_select %p36, %s38, %s29
      %p40 = scmp.ge.s32.totalorder %s39, 3
      %s41 = scalar_select %p40, 0, %s39
      %s42 = ssub.s32 %s29, %s41
      %p43 = scmp.eq.s32.totalorder %s42, 0
      %s45 = sadd.s32 %s44, 1
      %s46 = scalar_select %p43, %s44, %s45
      %p49 = pneg %p43
      %p50 = scmp.eq.s32.totalorder %s22, 11
      %p51 = por %p49, %p50
      %p52 = scmp.ne.s32.totalorder %s44, %s47
      %p53 = scmp.eq.s32.totalorder %s22, 0
      %p54 = por %p52, %p53
      %p55 = scmp.ne.s32.totalorder %s44, %s47
      %p56 = scmp.eq.s32.totalorder %s27, 11
      %p57 = por %p55, %p56
      %p58 = scmp.ne.s32.totalorder %s47, %s48
      %p59 = scmp.eq.s32.totalorder %s27, 0
      %p60 = por %p58, %p59
      %p61 = scmp.ne.s32.totalorder %s47, %s48
      %p62 = scmp.eq.s32.totalorder %s28, 11
      %p63 = por %p61, %p62
      %p65 = scmp.ne.s32.totalorder %s48, %s64
      %p66 = scmp.eq.s32.totalorder %s28, 0
      %p67 = por %p65, %p66
      %s68 = ssub.s32 %s30, %s37
      %p69 = scmp.eq.s32.totalorder %s68, 0
      %s71 = sadd.s32 %s70, 1
      %s72 = scalar_select %p69, %s70, %s71
      %p75 = pneg %p69
      %p76 = scmp.eq.s32.totalorder %s22, 11
      %p77 = por %p75, %p76
      %p78 = scmp.ne.s32.totalorder %s70, %s73
      %p79 = scmp.eq.s32.totalorder %s22, 0
      %p80 = por %p78, %p79
      %p81 = scmp.ne.s32.totalorder %s70, %s73
      %p82 = scmp.eq.s32.totalorder %s27, 11
      %p83 = por %p81, %p82
      %p84 = scmp.ne.s32.totalorder %s73, %s74
      %p85 = scmp.eq.s32.totalorder %s27, 0
      %p86 = por %p84, %p85
      %p87 = scmp.ne.s32.totalorder %s73, %s74
      %p88 = scmp.eq.s32.totalorder %s28, 11
      %p89 = por %p87, %p88
      %p91 = scmp.ne.s32.totalorder %s74, %s90
      %p92 = scmp.eq.s32.totalorder %s28, 0
      %p93 = por %p91, %p92
      %s94 = ssub.s32 %s30, %s37
      %p95 = scmp.eq.s32.totalorder %s94, 0
      %s97 = sadd.s32 %s96, 1
      %s98 = scalar_select %p95, %s96, %s97
      %p101 = pneg %p95
      %p102 = scmp.eq.s32.totalorder %s22, 11
      %p103 = por %p101, %p102
      %p104 = scmp.ne.s32.totalorder %s96, %s99
      %p105 = scmp.eq.s32.totalorder %s22, 0
      %p106 = por %p104, %p105
      %p107 = scmp.ne.s32.totalorder %s96, %s99
      %p108 = scmp.eq.s32.totalorder %s27, 11
      %p109 = por %p107, %p108
      %p110 = scmp.ne.s32.totalorder %s99, %s100
      %p111 = scmp.eq.s32.totalorder %s27, 0
      %p112 = por %p110, %p111
      %p113 = scmp.ne.s32.totalorder %s99, %s100
      %p114 = scmp.eq.s32.totalorder %s28, 11
      %p115 = por %p113, %p114
      %p117 = scmp.ne.s32.totalorder %s100, %s116
      %p118 = scmp.eq.s32.totalorder %s28, 0
      %p119 = por %p117, %p118
      %s120 = ssub.s32 %s30, %s37
      %p121 = scmp.eq.s32.totalorder %s120, 0
      %s123 = sadd.s32 %s122, 1
      %s124 = scalar_select %p121, %s122, %s123
      %p127 = pneg %p121
      %p128 = scmp.eq.s32.totalorder %s22, 11
      %p129 = por %p127, %p128
      %p130 = scmp.ne.s32.totalorder %s122, %s125
      %p131 = scmp.eq.s32.totalorder %s22, 0
      %p132 = por %p130, %p131
      %p133 = scmp.ne.s32.totalorder %s122, %s125
      %p134 = scmp.eq.s32.totalorder %s27, 11
      %p135 = por %p133, %p134
      %p136 = scmp.ne.s32.totalorder %s125, %s126
      %p137 = scmp.eq.s32.totalorder %s27, 0
      %p138 = por %p136, %p137
      %p139 = scmp.ne.s32.totalorder %s125, %s126
      %p140 = scmp.eq.s32.totalorder %s28, 11
      %p141 = por %p139, %p140
      %p143 = scmp.ne.s32.totalorder %s126, %s142
      %p144 = scmp.eq.s32.totalorder %s28, 0
      %p145 = por %p143, %p144
      %s146 = ssub.s32 %s29, %s41
      %p147 = scmp.eq.s32.totalorder %s146, 0
      %s149 = sadd.s32 %s148, 1
      %s150 = scalar_select %p147, %s148, %s149
      %p153 = pneg %p147
      %p154 = scmp.eq.s32.totalorder %s22, 11
      %p155 = por %p153, %p154
      %p156 = scmp.ne.s32.totalorder %s148, %s151
      %p157 = scmp.eq.s32.totalorder %s22, 0
      %p158 = por %p156, %p157
      %p159 = scmp.ne.s32.totalorder %s148, %s151
      %p160 = scmp.eq.s32.totalorder %s27, 11
      %p161 = por %p159, %p160
      %p162 = scmp.ne.s32.totalorder %s151, %s152
      %p163 = scmp.eq.s32.totalorder %s27, 0
      %p164 = por %p162, %p163
      %p165 = scmp.ne.s32.totalorder %s151, %s152
      %p166 = scmp.eq.s32.totalorder %s28, 11
      %p167 = por %p165, %p166
      %p169 = scmp.ne.s32.totalorder %s152, %s168
      %p170 = scmp.eq.s32.totalorder %s28, 0
      %p171 = por %p169, %p170
      %p172 = scmp.le.s32.totalorder 1, %s22
      %p173 = scmp.lt.s32.totalorder %s22, 13
      %p174 = pnand %p172, %p173
      %p175 = pneg %p174
      // Predicated region
      $region9: #{tpu_custom_call.1} parent=5 // pred_check
        _
      $region10: #{tpu_custom_call.1} parent=5 // pred_check_branch
        %177 = sbr.rel (%p174) target = $region12
      $region11: #{tpu_custom_call.1} parent=5 // pred_region
        %s178 = ssub.s32 %s22, 1
      $region12: #{tpu_custom_call.1} parent=5 // pred_fallthru
        _
      %p179 = scmp.lt.s32.totalorder %s22, 12
      // Predicated region
      $region13: #{tpu_custom_call.1} parent=5 // pred_check
        %p180 = pneg %p179
      $region14: #{tpu_custom_call.1} parent=5 // pred_check_branch
        %182 = sbr.rel (%p180) target = $region16
      $region15: #{tpu_custom_call.1} parent=5 // pred_region
        // Predicated region
        $region17: #{tpu_custom_call.1} parent=15 // pred_check
          %p183 = pneg %p54
        $region18: #{tpu_custom_call.1} parent=15 // pred_check_branch
          %185 = sbr.rel (%p183) target = $region20
        $region19: #{tpu_custom_call.1} parent=15 // pred_region
          %s186 = sand.u32 %s44, 1
          %s187 = scalar_lea.sflag [#allocation4], %s186
          %s188 = sand.u32 %s44, 1
          %s189 = smul.addr %s188, 32
          %s190 = scalar_lea.vmem [#allocation3], %s189
          %s191 = smul.u32 2, %s29
          %193 = vsyncadd %s187, 0
          %s194 = smul.addr %s191, 2
          %s195 = smul.addr %s194, 8
          %s196 = scalar_lea.hbm %s0, %s195
          %s197 = sshll.u32 %s196, 4
          %s198 = int_to_ptr.hbm [resolvable:$true] %s197
          %s199 = sshll.u32 %s190, 4
          %s200 = int_to_ptr.vmem [resolvable:$true] %s199
          %205 = dma.hbm_to_vmem [thread:$0]  %s198, 512, %s200, %s187, 256, 256, 16
        $region20: #{tpu_custom_call.1} parent=15 // pred_fallthru
          _
        // Predicated region
        $region21: #{tpu_custom_call.1} parent=15 // pred_check
          %p206 = pneg %p80
        $region22: #{tpu_custom_call.1} parent=15 // pred_check_branch
          %208 = sbr.rel (%p206) target = $region24
        $region23: #{tpu_custom_call.1} parent=15 // pred_region
          %s209 = sand.u32 %s22, 1
          %s210 = scalar_lea.sflag [#allocation7], %s209
          %s211 = sand.u32 %s70, 1
          %s212 = smul.addr %s211, 256
          %s213 = scalar_lea.vmem [#allocation6], %s212
          %s214 = smul.u32 16, %s30
          %216 = vsyncadd %s210, 0
          %s217 = smul.addr %s214, 2
          %s218 = smul.addr %s217, 8
          %s219 = scalar_lea.hbm %s1, %s218
          %s220 = sshll.u32 %s219, 4
          %s221 = int_to_ptr.hbm [resolvable:$true] %s220
          %s222 = sshll.u32 %s213, 4
          %s223 = int_to_ptr.vmem [resolvable:$true] %s222
          %228 = dma.hbm_to_vmem [thread:$0]  %s221, 4096, %s223, %s210, 256, 256, 16
        $region24: #{tpu_custom_call.1} parent=15 // pred_fallthru
          _
        // Predicated region
        $region25: #{tpu_custom_call.1} parent=15 // pred_check
          %p229 = pneg %p106
        $region26: #{tpu_custom_call.1} parent=15 // pred_check_branch
          %231 = sbr.rel (%p229) target = $region28
        $region27: #{tpu_custom_call.1} parent=15 // pred_region
          %s232 = sand.u32 %s22, 1
          %s233 = scalar_lea.sflag [#allocation7], %s232
          %s234 = sand.u32 %s96, 1
          %s235 = smul.addr %s234, 256
          %s236 = scalar_lea.vmem [#allocation8], %s235
          %s237 = smul.u32 16, %s30
          %239 = vsyncadd %s233, 0
          %s240 = smul.addr %s237, 2
          %s241 = smul.addr %s240, 8
          %s242 = scalar_lea.hbm %s2, %s241
          %s243 = sshll.u32 %s242, 4
          %s244 = int_to_ptr.hbm [resolvable:$true] %s243
          %s245 = sshll.u32 %s236, 4
          %s246 = int_to_ptr.vmem [resolvable:$true] %s245
          %251 = dma.hbm_to_vmem [thread:$0]  %s244, 4096, %s246, %s233, 256, 256, 16
        $region28: #{tpu_custom_call.1} parent=15 // pred_fallthru
          _
        // Predicated region
        $region29: #{tpu_custom_call.1} parent=15 // pred_check
          %p252 = pneg %p132
        $region30: #{tpu_custom_call.1} parent=15 // pred_check_branch
          %254 = sbr.rel (%p252) target = $region32
        $region31: #{tpu_custom_call.1} parent=15 // pred_region
          %s255 = sand.u32 %s122, 1
          %s256 = scalar_lea.sflag [#allocation10], %s255
          %s257 = sand.u32 %s122, 1
          %s258 = smul.addr %s257, 256
          %s259 = scalar_lea.vmem [#allocation9], %s258
          %261 = vsyncadd %s256, 0
          %s262 = smul.addr %s30, 8
          %s263 = scalar_lea.hbm %s3, %s262
          %s264 = sshll.u32 %s263, 4
          %s265 = int_to_ptr.hbm [resolvable:$true] %s264
          %s266 = sshll.u32 %s259, 4
          %s267 = int_to_ptr.vmem [resolvable:$true] %s266
          %272 = dma.hbm_to_vmem [thread:$0]  %s265, 4096, %s267, %s256, 512, 128, 8
        $region32: #{tpu_custom_call.1} parent=15 // pred_fallthru
          _
      $region16: #{tpu_custom_call.1} parent=5 // pred_fallthru
        _
      %p273 = scmp.le.s32.totalorder 1, %s22
      %p274 = scmp.lt.s32.totalorder %s22, 13
      %p275 = pnand %p273, %p274
      %p276 = pneg %p275
      // Predicated region
      $region33: #{tpu_custom_call.1} parent=5 // pred_check
        _
      $region34: #{tpu_custom_call.1} parent=5 // pred_check_branch
        %278 = sbr.rel (%p275) target = $region36
      $region35: #{tpu_custom_call.1} parent=5 // pred_region
        %s279 = ssub.s32 %s22, 1
        %s280 = sand.u32 %s47, 1
        %s281 = scalar_lea.sflag [#allocation4], %s280
        %s282 = sand.u32 %s47, 1
        %s283 = smul.addr %s282, 32
        %s284 = scalar_lea.vmem [#allocation3], %s283
        // Predicated region
        $region37: #{tpu_custom_call.1} parent=35 // pred_check
          %p285 = pneg %p60
        $region38: #{tpu_custom_call.1} parent=35 // pred_check_branch
          %287 = sbr.rel (%p285) target = $region40
        $region39: #{tpu_custom_call.1} parent=35 // pred_region
          %289 = dma.done %s281, 512
        $region40: #{tpu_custom_call.1} parent=35 // pred_fallthru
          _
        %s290 = sand.u32 %s27, 1
        %s291 = scalar_lea.sflag [#allocation7], %s290
        %s292 = sand.u32 %s73, 1
        %s293 = smul.addr %s292, 256
        %s294 = scalar_lea.vmem [#allocation6], %s293
        // Predicated region
        $region41: #{tpu_custom_call.1} parent=35 // pred_check
          %p295 = pneg %p86
        $region42: #{tpu_custom_call.1} parent=35 // pred_check_branch
          %297 = sbr.rel (%p295) target = $region44
        $region43: #{tpu_custom_call.1} parent=35 // pred_region
          %299 = dma.done %s291, 4096
        $region44: #{tpu_custom_call.1} parent=35 // pred_fallthru
          _
        %s300 = sand.u32 %s27, 1
        %s301 = scalar_lea.sflag [#allocation7], %s300
        %s302 = sand.u32 %s99, 1
        %s303 = smul.addr %s302, 256
        %s304 = scalar_lea.vmem [#allocation8], %s303
        // Predicated region
        $region45: #{tpu_custom_call.1} parent=35 // pred_check
          %p305 = pneg %p112
        $region46: #{tpu_custom_call.1} parent=35 // pred_check_branch
          %307 = sbr.rel (%p305) target = $region48
        $region47: #{tpu_custom_call.1} parent=35 // pred_region
          %309 = dma.done %s301, 4096
        $region48: #{tpu_custom_call.1} parent=35 // pred_fallthru
          _
        %s310 = sand.u32 %s125, 1
        %s311 = scalar_lea.sflag [#allocation10], %s310
        %s312 = sand.u32 %s125, 1
        %s313 = smul.addr %s312, 256
        %s314 = scalar_lea.vmem [#allocation9], %s313
        // Predicated region
        $region49: #{tpu_custom_call.1} parent=35 // pred_check
          %p315 = pneg %p138
        $region50: #{tpu_custom_call.1} parent=35 // pred_check_branch
          %317 = sbr.rel (%p315) target = $region52
        $region51: #{tpu_custom_call.1} parent=35 // pred_region
          %319 = dma.done %s311, 4096
        $region52: #{tpu_custom_call.1} parent=35 // pred_fallthru
          _
        %s320 = sand.u32 %s47, 1
        %s321 = scalar_lea.sflag [#allocation4], %s320
        %s322 = sand.u32 %s47, 1
        %s323 = smul.addr %s322, 32
        %s324 = scalar_lea.vmem [#allocation3], %s323
        %p325 = pneg %p60
        %p326 = pneg %p57
        %s327 = sand.u32 %s27, 1
        %s328 = scalar_lea.sflag [#allocation7], %s327
        %s329 = sand.u32 %s73, 1
        %s330 = smul.addr %s329, 256
        %s331 = scalar_lea.vmem [#allocation6], %s330
        %p332 = pneg %p86
        %p333 = pneg %p83
        %s334 = sand.u32 %s27, 1
        %s335 = scalar_lea.sflag [#allocation7], %s334
        %s336 = sand.u32 %s99, 1
        %s337 = smul.addr %s336, 256
        %s338 = scalar_lea.vmem [#allocation8], %s337
        %p339 = pneg %p112
        %p340 = pneg %p109
        %s341 = sand.u32 %s125, 1
        %s342 = scalar_lea.sflag [#allocation10], %s341
        %s343 = sand.u32 %s125, 1
        %s344 = smul.addr %s343, 256
        %s345 = scalar_lea.vmem [#allocation9], %s344
        %p346 = pneg %p138
        %p347 = pneg %p135
        %p348 = pneg %p164
        %p349 = pneg %p161
        %s350 = sand.u32 %s151, 1
        %s351 = scalar_lea.sflag [#allocation5], %s350
        %s352 = sand.u32 %s151, 1
        %s353 = smul.addr %s352, 32
        %s354 = scalar_lea.vmem [#allocation11], %s353
        %s355 = smul.u32 2, %s31
        %s356 = smul.u32 16, %s32
        %s357 = smul.u32 16, %s32
        %s358 = smul.u32 2, %s31
        %p359 = scmp.eq.s32.totalorder %s32, 0
        // Predicated region
        $region53: #{tpu_custom_call.1} parent=35 // pred_check
          %p360 = pneg %p359
        $region54: #{tpu_custom_call.1} parent=35 // pred_check_branch
          %362 = sbr.rel (%p360) target = $region56
        $region55: #{tpu_custom_call.1} parent=35 // pred_region
          %363 = vst [vmem:[#allocation2] sm:$0xff] 0.0
          %364 = vst [vmem:[#allocation2 + $0x8] sm:$0xff] 0.0
          %365 = vst [vmem:[#allocation2 + $0x10] sm:$0xff] 0.0
          %366 = vst [vmem:[#allocation2 + $0x18] sm:$0xff] 0.0
        $region56: #{tpu_custom_call.1} parent=35 // pred_fallthru
          _
        %v367 = vld [vmem:[%s284] sm:$0xff]
        %v368 = vld [vmem:[%s284 + $0x8] sm:$0xff]
        %v369 = vld [vmem:[%s284 + $0x10] sm:$0xff]
        %v370 = vld [vmem:[%s284 + $0x18] sm:$0xff]
        %v371 = vld [vmem:[%s294] sm:$0xff]
        %v372 = vld [vmem:[%s294 + $0x8] sm:$0xff]
        %v373 = vld [vmem:[%s294 + $0x10] sm:$0xff]
        %v374 = vld [vmem:[%s294 + $0x18] sm:$0xff]
        %v375 = vld [vmem:[%s294 + $0x20] sm:$0xff]
        %v376 = vld [vmem:[%s294 + $0x28] sm:$0xff]
        %v377 = vld [vmem:[%s294 + $0x30] sm:$0xff]
        %v378 = vld [vmem:[%s294 + $0x38] sm:$0xff]
        %v379 = vld [vmem:[%s294 + $0x40] sm:$0xff]
        %v380 = vld [vmem:[%s294 + $0x48] sm:$0xff]
        %v381 = vld [vmem:[%s294 + $0x50] sm:$0xff]
        %v382 = vld [vmem:[%s294 + $0x58] sm:$0xff]
        %v383 = vld [vmem:[%s294 + $0x60] sm:$0xff]
        %v384 = vld [vmem:[%s294 + $0x68] sm:$0xff]
        %v385 = vld [vmem:[%s294 + $0x70] sm:$0xff]
        %v386 = vld [vmem:[%s294 + $0x78] sm:$0xff]
        %v387 = vld [vmem:[%s294 + $0x80] sm:$0xff]
        %v388 = vld [vmem:[%s294 + $0x88] sm:$0xff]
        %v389 = vld [vmem:[%s294 + $0x90] sm:$0xff]
        %v390 = vld [vmem:[%s294 + $0x98] sm:$0xff]
        %v391 = vld [vmem:[%s294 + $0xa0] sm:$0xff]
        %v392 = vld [vmem:[%s294 + $0xa8] sm:$0xff]
        %v393 = vld [vmem:[%s294 + $0xb0] sm:$0xff]
        %v394 = vld [vmem:[%s294 + $0xb8] sm:$0xff]
        %v395 = vld [vmem:[%s294 + $0xc0] sm:$0xff]
        %v396 = vld [vmem:[%s294 + $0xc8] sm:$0xff]
        %v397 = vld [vmem:[%s294 + $0xd0] sm:$0xff]
        %v398 = vld [vmem:[%s294 + $0xd8] sm:$0xff]
        %v399 = vld [vmem:[%s294 + $0xe0] sm:$0xff]
        %v400 = vld [vmem:[%s294 + $0xe8] sm:$0xff]
        %v401 = vld [vmem:[%s294 + $0xf0] sm:$0xff]
        %v402 = vld [vmem:[%s294 + $0xf8] sm:$0xff]
        %403 = vmatpush.xpose.msra.mxu0 %v401
        %404 = vmatpush.xpose.msra.mxu0 %v399
        %405 = vmatpush.xpose.msra.mxu0 %v397
        %406 = vmatpush.xpose.msra.mxu0 %v395
        %407 = vmatpush.xpose.msra.mxu0 %v393
        %408 = vmatpush.xpose.msra.mxu0 %v391
        %409 = vmatpush.xpose.msra.mxu0 %v389
        %410 = vmatpush.xpose.msra.mxu0 %v387
        %411 = vmatpush.xpose.msra.mxu0 %v385
        %412 = vmatpush.xpose.msra.mxu0 %v383
        %413 = vmatpush.xpose.msra.mxu0 %v381
        %414 = vmatpush.xpose.msra.mxu0 %v379
        %415 = vmatpush.xpose.msra.mxu0 %v377
        %416 = vmatpush.xpose.msra.mxu0 %v375
        %417 = vmatpush.xpose.msra.mxu0 %v373
        %418 = vmatpush.xpose.msra.mxu0 %v371
        %419 = vmatmul.f32.gmra.mxu0 %v367
        %v420 = vpop.f32.mrf.mxu0
        %v421 = vadd.f32 0.0, %v420
        %422 = vmatmul.f32.gmra.mxu0 %v369
        %v423 = vpop.f32.mrf.mxu0
        %v424 = vadd.f32 0.0, %v423
        %425 = vdwg.mxu0
        %426 = vmatpush.xpose.msra.mxu0 %v402
        %427 = vmatpush.xpose.msra.mxu0 %v400
        %428 = vmatpush.xpose.msra.mxu0 %v398
        %429 = vmatpush.xpose.msra.mxu0 %v396
        %430 = vmatpush.xpose.msra.mxu0 %v394
        %431 = vmatpush.xpose.msra.mxu0 %v392
        %432 = vmatpush.xpose.msra.mxu0 %v390
        %433 = vmatpush.xpose.msra.mxu0 %v388
        %434 = vmatpush.xpose.msra.mxu0 %v386
        %435 = vmatpush.xpose.msra.mxu0 %v384
        %436 = vmatpush.xpose.msra.mxu0 %v382
        %437 = vmatpush.xpose.msra.mxu0 %v380
        %438 = vmatpush.xpose.msra.mxu0 %v378
        %439 = vmatpush.xpose.msra.mxu0 %v376
        %440 = vmatpush.xpose.msra.mxu0 %v374
        %441 = vmatpush.xpose.msra.mxu0 %v372
        %442 = vmatmul.f32.gmra.mxu0 %v368
        %v443 = vpop.f32.mrf.mxu0
        %v444 = vadd.f32 %v421, %v443
        %445 = vmatmul.f32.gmra.mxu0 %v370
        %v446 = vpop.f32.mrf.mxu0
        %v447 = vadd.f32 %v424, %v446
        %448 = vdwg.mxu0
        %v449 = vld [vmem:[%s304] sm:$0xff]
        %v450 = vld [vmem:[%s304 + $0x8] sm:$0xff]
        %v451 = vld [vmem:[%s304 + $0x10] sm:$0xff]
        %v452 = vld [vmem:[%s304 + $0x18] sm:$0xff]
        %v453 = vld [vmem:[%s304 + $0x20] sm:$0xff]
        %v454 = vld [vmem:[%s304 + $0x28] sm:$0xff]
        %v455 = vld [vmem:[%s304 + $0x30] sm:$0xff]
        %v456 = vld [vmem:[%s304 + $0x38] sm:$0xff]
        %v457 = vld [vmem:[%s304 + $0x40] sm:$0xff]
        %v458 = vld [vmem:[%s304 + $0x48] sm:$0xff]
        %v459 = vld [vmem:[%s304 + $0x50] sm:$0xff]
        %v460 = vld [vmem:[%s304 + $0x58] sm:$0xff]
        %v461 = vld [vmem:[%s304 + $0x60] sm:$0xff]
        %v462 = vld [vmem:[%s304 + $0x68] sm:$0xff]
        %v463 = vld [vmem:[%s304 + $0x70] sm:$0xff]
        %v464 = vld [vmem:[%s304 + $0x78] sm:$0xff]
        %v465 = vld [vmem:[%s304 + $0x80] sm:$0xff]
        %v466 = vld [vmem:[%s304 + $0x88] sm:$0xff]
        %v467 = vld [vmem:[%s304 + $0x90] sm:$0xff]
        %v468 = vld [vmem:[%s304 + $0x98] sm:$0xff]
        %v469 = vld [vmem:[%s304 + $0xa0] sm:$0xff]
        %v470 = vld [vmem:[%s304 + $0xa8] sm:$0xff]
        %v471 = vld [vmem:[%s304 + $0xb0] sm:$0xff]
        %v472 = vld [vmem:[%s304 + $0xb8] sm:$0xff]
        %v473 = vld [vmem:[%s304 + $0xc0] sm:$0xff]
        %v474 = vld [vmem:[%s304 + $0xc8] sm:$0xff]
        %v475 = vld [vmem:[%s304 + $0xd0] sm:$0xff]
        %v476 = vld [vmem:[%s304 + $0xd8] sm:$0xff]
        %v477 = vld [vmem:[%s304 + $0xe0] sm:$0xff]
        %v478 = vld [vmem:[%s304 + $0xe8] sm:$0xff]
        %v479 = vld [vmem:[%s304 + $0xf0] sm:$0xff]
        %v480 = vld [vmem:[%s304 + $0xf8] sm:$0xff]
        %481 = vmatpush.xpose.msra.mxu0 %v479
        %482 = vmatpush.xpose.msra.mxu0 %v477
        %483 = vmatpush.xpose.msra.mxu0 %v475
        %484 = vmatpush.xpose.msra.mxu0 %v473
        %485 = vmatpush.xpose.msra.mxu0 %v471
        %486 = vmatpush.xpose.msra.mxu0 %v469
        %487 = vmatpush.xpose.msra.mxu0 %v467
        %488 = vmatpush.xpose.msra.mxu0 %v465
        %489 = vmatpush.xpose.msra.mxu0 %v463
        %490 = vmatpush.xpose.msra.mxu0 %v461
        %491 = vmatpush.xpose.msra.mxu0 %v459
        %492 = vmatpush.xpose.msra.mxu0 %v457
        %493 = vmatpush.xpose.msra.mxu0 %v455
        %494 = vmatpush.xpose.msra.mxu0 %v453
        %495 = vmatpush.xpose.msra.mxu0 %v451
        %496 = vmatpush.xpose.msra.mxu0 %v449
        %497 = vmatmul.f32.gmra.mxu0 %v367
        %v498 = vpop.f32.mrf.mxu0
        %v499 = vadd.f32 0.0, %v498
        %500 = vmatmul.f32.gmra.mxu0 %v369
        %v501 = vpop.f32.mrf.mxu0
        %v502 = vadd.f32 0.0, %v501
        %503 = vdwg.mxu0
        %504 = vmatpush.xpose.msra.mxu0 %v480
        %505 = vmatpush.xpose.msra.mxu0 %v478
        %506 = vmatpush.xpose.msra.mxu0 %v476
        %507 = vmatpush.xpose.msra.mxu0 %v474
        %508 = vmatpush.xpose.msra.mxu0 %v472
        %509 = vmatpush.xpose.msra.mxu0 %v470
        %510 = vmatpush.xpose.msra.mxu0 %v468
        %511 = vmatpush.xpose.msra.mxu0 %v466
        %512 = vmatpush.xpose.msra.mxu0 %v464
        %513 = vmatpush.xpose.msra.mxu0 %v462
        %514 = vmatpush.xpose.msra.mxu0 %v460
        %515 = vmatpush.xpose.msra.mxu0 %v458
        %516 = vmatpush.xpose.msra.mxu0 %v456
        %517 = vmatpush.xpose.msra.mxu0 %v454
        %518 = vmatpush.xpose.msra.mxu0 %v452
        %519 = vmatpush.xpose.msra.mxu0 %v450
        %520 = vmatmul.f32.gmra.mxu0 %v368
        %v521 = vpop.f32.mrf.mxu0
        %v522 = vadd.f32 %v499, %v521
        %523 = vmatmul.f32.gmra.mxu0 %v370
        %v524 = vpop.f32.mrf.mxu0
        %v525 = vadd.f32 %v502, %v524
        %526 = vdwg.mxu0
        %v527 = vxor.u32 %v444, 2147483648
        %v528 = vxor.u32 %v447, 2147483648
        %v529 = vmul.f32 %v527, 1.442695
        %v530 = vpow.pop %v529
        %v531 = vmul.f32 %v528, 1.442695
        %v532 = vpow.pop %v531
        %v533 = vadd.f32 %v530, 1.0
        %v534 = vadd.f32 %v532, 1.0
        %v535 = vrcp.pop %v533
        %v536 = vmul.f32 %v533, %v535
        %v537 = vsub.f32 1.0, %v536
        %v538 = vmul.f32 %v535, %v537
        %v539 = vadd.f32 %v535, %v538
        %vm540 = vweird.f32 %v533
        %vm541 = vweird.f32 %v535
        %vm542 = vmor %vm540, %vm541
        %v543 = vsel %vm542, %v535, %v539
        %v544 = vand.u32 2147483647, %v533
        %vm545 = vcmp.eq.f32.partialorder %v544, 8.507059e+37
        %v546 = vand.u32 %v533, 2147483648
        %v547 = vor.u32 1.1754944e-38, %v546
        %v548 = vsel %vm545, %v547, %v543
        %v549 = vmul.f32 1.0, %v548
        %v550 = vrcp.pop %v534
        %v551 = vmul.f32 %v534, %v550
        %v552 = vsub.f32 1.0, %v551
        %v553 = vmul.f32 %v550, %v552
        %v554 = vadd.f32 %v550, %v553
        %vm555 = vweird.f32 %v534
        %vm556 = vweird.f32 %v550
        %vm557 = vmor %vm555, %vm556
        %v558 = vsel %vm557, %v550, %v554
        %v559 = vand.u32 2147483647, %v534
        %vm560 = vcmp.eq.f32.partialorder %v559, 8.507059e+37
        %v561 = vand.u32 %v534, 2147483648
        %v562 = vor.u32 1.1754944e-38, %v561
        %v563 = vsel %vm560, %v562, %v558
        %v564 = vmul.f32 1.0, %v563
        %v565 = vmul.f32 %v444, %v549
        %v566 = vmul.f32 %v447, %v564
        %v567 = vmul.f32 %v565, %v522
        %v568 = vmul.f32 %v566, %v525
        %v569 = vld [vmem:[#allocation2] sm:$0xff]
        %v570 = vld [vmem:[#allocation2 + $0x8] sm:$0xff]
        %v571 = vld [vmem:[#allocation2 + $0x10] sm:$0xff]
        %v572 = vld [vmem:[#allocation2 + $0x18] sm:$0xff]
        %v573 = vld [vmem:[%s314] sm:$0xff]
        %v574 = vld [vmem:[%s314 + $0x8] sm:$0xff]
        %v575 = vld [vmem:[%s314 + $0x10] sm:$0xff]
        %v576 = vld [vmem:[%s314 + $0x18] sm:$0xff]
        %v577 = vld [vmem:[%s314 + $0x20] sm:$0xff]
        %v578 = vld [vmem:[%s314 + $0x28] sm:$0xff]
        %v579 = vld [vmem:[%s314 + $0x30] sm:$0xff]
        %v580 = vld [vmem:[%s314 + $0x38] sm:$0xff]
        %v581 = vld [vmem:[%s314 + $0x40] sm:$0xff]
        %v582 = vld [vmem:[%s314 + $0x48] sm:$0xff]
        %v583 = vld [vmem:[%s314 + $0x50] sm:$0xff]
        %v584 = vld [vmem:[%s314 + $0x58] sm:$0xff]
        %v585 = vld [vmem:[%s314 + $0x60] sm:$0xff]
        %v586 = vld [vmem:[%s314 + $0x68] sm:$0xff]
        %v587 = vld [vmem:[%s314 + $0x70] sm:$0xff]
        %v588 = vld [vmem:[%s314 + $0x78] sm:$0xff]
        %v589 = vld [vmem:[%s314 + $0x80] sm:$0xff]
        %v590 = vld [vmem:[%s314 + $0x88] sm:$0xff]
        %v591 = vld [vmem:[%s314 + $0x90] sm:$0xff]
        %v592 = vld [vmem:[%s314 + $0x98] sm:$0xff]
        %v593 = vld [vmem:[%s314 + $0xa0] sm:$0xff]
        %v594 = vld [vmem:[%s314 + $0xa8] sm:$0xff]
        %v595 = vld [vmem:[%s314 + $0xb0] sm:$0xff]
        %v596 = vld [vmem:[%s314 + $0xb8] sm:$0xff]
        %v597 = vld [vmem:[%s314 + $0xc0] sm:$0xff]
        %v598 = vld [vmem:[%s314 + $0xc8] sm:$0xff]
        %v599 = vld [vmem:[%s314 + $0xd0] sm:$0xff]
        %v600 = vld [vmem:[%s314 + $0xd8] sm:$0xff]
        %v601 = vld [vmem:[%s314 + $0xe0] sm:$0xff]
        %v602 = vld [vmem:[%s314 + $0xe8] sm:$0xff]
        %v603 = vld [vmem:[%s314 + $0xf0] sm:$0xff]
        %v604 = vld [vmem:[%s314 + $0xf8] sm:$0xff]
        %605 = vmatpush.xpose.msra.mxu0 %v588
        %606 = vmatpush.xpose.msra.mxu0 %v587
        %607 = vmatpush.xpose.msra.mxu0 %v586
        %608 = vmatpush.xpose.msra.mxu0 %v585
        %609 = vmatpush.xpose.msra.mxu0 %v584
        %610 = vmatpush.xpose.msra.mxu0 %v583
        %611 = vmatpush.xpose.msra.mxu0 %v582
        %612 = vmatpush.xpose.msra.mxu0 %v581
        %613 = vmatpush.xpose.msra.mxu0 %v580
        %614 = vmatpush.xpose.msra.mxu0 %v579
        %615 = vmatpush.xpose.msra.mxu0 %v578
        %616 = vmatpush.xpose.msra.mxu0 %v577
        %617 = vmatpush.xpose.msra.mxu0 %v576
        %618 = vmatpush.xpose.msra.mxu0 %v575
        %619 = vmatpush.xpose.msra.mxu0 %v574
        %620 = vmatpush.xpose.msra.mxu0 %v573
        %621 = vmatmul.f32.gmra.mxu0 %v567
        %v622 = vpop.f32.mrf.mxu0
        %v623 = vadd.f32 0.0, %v622
        %624 = vmatmul.f32.gmra.mxu0 %v568
        %v625 = vpop.f32.mrf.mxu0
        %v626 = vadd.f32 0.0, %v625
        %627 = vdwg.mxu0
        %628 = vmatpush.xpose.msra.mxu0 %v604
        %629 = vmatpush.xpose.msra.mxu0 %v603
        %630 = vmatpush.xpose.msra.mxu0 %v602
        %631 = vmatpush.xpose.msra.mxu0 %v601
        %632 = vmatpush.xpose.msra.mxu0 %v600
        %633 = vmatpush.xpose.msra.mxu0 %v599
        %634 = vmatpush.xpose.msra.mxu0 %v598
        %635 = vmatpush.xpose.msra.mxu0 %v597
        %636 = vmatpush.xpose.msra.mxu0 %v596
        %637 = vmatpush.xpose.msra.mxu0 %v595
        %638 = vmatpush.xpose.msra.mxu0 %v594
        %639 = vmatpush.xpose.msra.mxu0 %v593
        %640 = vmatpush.xpose.msra.mxu0 %v592
        %641 = vmatpush.xpose.msra.mxu0 %v591
        %642 = vmatpush.xpose.msra.mxu0 %v590
        %643 = vmatpush.xpose.msra.mxu0 %v589
        %644 = vmatmul.f32.gmra.mxu0 %v567
        %v645 = vpop.f32.mrf.mxu0
        %v646 = vadd.f32 0.0, %v645
        %647 = vmatmul.f32.gmra.mxu0 %v568
        %v648 = vpop.f32.mrf.mxu0
        %v649 = vadd.f32 0.0, %v648
        %650 = vdwg.mxu0
        %v651 = vadd.f32 %v569, %v623
        %v652 = vadd.f32 %v570, %v646
        %v653 = vadd.f32 %v571, %v626
        %v654 = vadd.f32 %v572, %v649
        %655 = vst [vmem:[#allocation2] sm:$0xff] %v651
        %656 = vst [vmem:[#allocation2 + $0x8] sm:$0xff] %v652
        %657 = vst [vmem:[#allocation2 + $0x10] sm:$0xff] %v653
        %658 = vst [vmem:[#allocation2 + $0x18] sm:$0xff] %v654
        %p659 = scmp.eq.s32.totalorder %s32, 3
        // Predicated region
        $region57: #{tpu_custom_call.1} parent=35 // pred_check
          %p660 = pneg %p659
        $region58: #{tpu_custom_call.1} parent=35 // pred_check_branch
          %662 = sbr.rel (%p660) target = $region60
        $region59: #{tpu_custom_call.1} parent=35 // pred_region
          %v663 = vld [vmem:[#allocation2] sm:$0xff]
          %v664 = vld [vmem:[#allocation2 + $0x8] sm:$0xff]
          %v665 = vld [vmem:[#allocation2 + $0x10] sm:$0xff]
          %v666 = vld [vmem:[#allocation2 + $0x18] sm:$0xff]
          %667 = vst [vmem:[%s354] sm:$0xff] %v663
          %668 = vst [vmem:[%s354 + $0x8] sm:$0xff] %v664
          %669 = vst [vmem:[%s354 + $0x10] sm:$0xff] %v665
          %670 = vst [vmem:[%s354 + $0x18] sm:$0xff] %v666
        $region60: #{tpu_custom_call.1} parent=35 // pred_fallthru
          _
        %s671 = sand.u32 %s151, 1
        %s672 = scalar_lea.sflag [#allocation5], %s671
        %s673 = sand.u32 %s151, 1
        %s674 = smul.addr %s673, 32
        %s675 = scalar_lea.vmem [#allocation11], %s674
        // Predicated region
        $region61: #{tpu_custom_call.1} parent=35 // pred_check
          %p676 = pneg %p161
        $region62: #{tpu_custom_call.1} parent=35 // pred_check_branch
          %678 = sbr.rel (%p676) target = $region64
        $region63: #{tpu_custom_call.1} parent=35 // pred_region
          %s679 = smul.u32 2, %s31
          %681 = vsyncadd %s672, 0
          %s682 = smul.addr %s679, 2
          %s683 = smul.addr %s682, 8
          %s684 = scalar_lea.hbm %s4, %s683
          %s685 = sshll.u32 %s675, 4
          %s686 = int_to_ptr.vmem [resolvable:$true] %s685
          %s687 = sshll.u32 %s684, 4
          %s688 = int_to_ptr.hbm [resolvable:$true] %s687
          %693 = dma.vmem_to_hbm [thread:$0]  %s686, 512, %s688, %s672, 256, 256, 16
        $region64: #{tpu_custom_call.1} parent=35 // pred_fallthru
          _
      $region36: #{tpu_custom_call.1} parent=5 // pred_fallthru
        _
      %p694 = scmp.le.s32.totalorder 2, %s22
      // Predicated region
      $region65: #{tpu_custom_call.1} parent=5 // pred_check
        %p695 = pneg %p694
      $region66: #{tpu_custom_call.1} parent=5 // pred_check_branch
        %697 = sbr.rel (%p695) target = $region68
      $region67: #{tpu_custom_call.1} parent=5 // pred_region
        %s698 = ssub.s32 %s22, 2
        // Predicated region
        $region69: #{tpu_custom_call.1} parent=67 // pred_check
          %p699 = pneg %p167
        $region70: #{tpu_custom_call.1} parent=67 // pred_check_branch
          %701 = sbr.rel (%p699) target = $region72
        $region71: #{tpu_custom_call.1} parent=67 // pred_region
          %s702 = sand.u32 %s152, 1
          %s703 = scalar_lea.sflag [#allocation5], %s702
          %s704 = sand.u32 %s152, 1
          %s705 = smul.addr %s704, 32
          %s706 = scalar_lea.vmem [#allocation11], %s705
          %708 = dma.done %s703, 512
        $region72: #{tpu_custom_call.1} parent=67 // pred_fallthru
          _
      $region68: #{tpu_custom_call.1} parent=5 // pred_fallthru
        _
    $region6: #{tpu_custom_call.1} parent=1 // loop_footer
      %s26 = sadd.s32 1, %s22
    $region7: #{tpu_custom_call.1} parent=1 // loop_footer_branch
      %21 = sbr.rel target = $region3
    $region8: #{tpu_custom_call.1} parent=1 // loop_exit
      _
    %709 = vsyncpa [#allocation4], 1
    %s710 = scalar_lea.sflag [#allocation4], 1
    %711 = vsyncpa %s710, 1
    %712 = vsyncpa [#allocation7], 1
    %s713 = scalar_lea.sflag [#allocation7], 1
    %714 = vsyncpa %s713, 1
    %715 = vsyncpa [#allocation10], 1
    %s716 = scalar_lea.sflag [#allocation10], 1
    %717 = vsyncpa %s716, 1
    %718 = vsyncpa [#allocation5], 1
    %s719 = scalar_lea.sflag [#allocation5], 1
    %720 = vsyncpa %s719, 1

</llo_original>
